<compile_context>
chip_gen: v7x
topology: tpu7x:2x2x1
jax: 0.10.0
libtpu: 0.0.40
codegen_flags: <defaults>
</compile_context>

<pallas_src>
import math

import jax
import jax.numpy as jnp
from jax.experimental import pallas as pl
from jax.experimental.pallas import tpu as pltpu

FEATURES = 3
IN_DIM = 10
HID = 6

# ---- packed parameter slab (feature-major weights: (out, in); biases as ----
# ---- column vectors).  Every region starts on an 8-row sublane boundary. ---
_W1T, _B1 = 0, 8        # w1: (6, 10) rows  0:6 ; b1: (6, 1) rows  8:14
_W2T, _B2 = 16, 24      # w2: (6, 6)  rows 16:22; b2: (6, 1) rows 24:30
_W3T, _B3 = 32, 40      # w3: (6, 3)  rows 32:38; b3: (6, 1) rows 40:46
_W4T, _B4 = 48, 64      # w4: (10, 6) rows 48:58; b4: (10,1) rows 64:74
SLAB_ROWS, SLAB_COLS = 80, 16


def _encode(slab_ref, xt):
    """Shared encoder: xt is (10, TB) feature-major; returns enc (6, TB)."""
    w1 = slab_ref[_W1T:_W1T + HID, 0:IN_DIM]          # (6, 10)
    b1 = slab_ref[_B1:_B1 + HID, 0:1]                 # (6, 1)
    w2 = slab_ref[_W2T:_W2T + HID, 0:HID]             # (6, 6)
    b2 = slab_ref[_B2:_B2 + HID, 0:1]                 # (6, 1)
    h = jnp.dot(w1, xt, preferred_element_type=jnp.float32) + b1
    h = jnp.maximum(h, 0.0)                           # (6, TB)
    return jnp.dot(w2, h, preferred_element_type=jnp.float32) + b2


def max_logvar_kernel(xt_ref, slab_ref, max_ref):
    """Pass 1: running max of log_var over the whole (padded) batch."""
    enc = _encode(slab_ref, xt_ref[...])              # (6, TB)
    lv = enc[FEATURES:2 * FEATURES, :]                # (3, TB)
    m = jnp.max(lv, axis=1, keepdims=True)            # (3, 1) lane reduce
    m = jnp.max(m, axis=0, keepdims=True)             # (1, 1) sublane reduce

    @pl.when(pl.program_id(0) == 0)
    def _():
        max_ref[...] = jnp.full_like(max_ref, -jnp.inf)

    max_ref[...] = jnp.maximum(max_ref[...], m)


def vae_kernel(scal_ref, xt_ref, slab_ref, out_ref):
    """Pass 2: full forward for one (10, TB) feature-major batch tile."""
    xt = xt_ref[...]                                  # (10, TB)

    # encoder -> enc rows 0:3 = mu, rows 3:6 = log_var
    enc = _encode(slab_ref, xt)                       # (6, TB)
    mu = enc[0:FEATURES, :]                           # (3, TB)

    # reparameterize with the precomputed batch-global std and scalar eps
    eps = scal_ref[0]
    std = scal_ref[1]
    z = mu + eps * std                                # (3, TB)

    # decoder
    w3 = slab_ref[_W3T:_W3T + HID, 0:FEATURES]        # (6, 3)
    b3 = slab_ref[_B3:_B3 + HID, 0:1]                 # (6, 1)
    w4 = slab_ref[_W4T:_W4T + IN_DIM, 0:HID]          # (10, 6)
    b4 = slab_ref[_B4:_B4 + IN_DIM, 0:1]              # (10, 1)
    h2 = jnp.dot(w3, z, preferred_element_type=jnp.float32) + b3
    h2 = jnp.maximum(h2, 0.0)                         # (6, TB)
    logits = jnp.dot(w4, h2, preferred_element_type=jnp.float32) + b4
    rec = jax.nn.sigmoid(logits)                      # (10, TB)

    # split [6, 3, 1] along rows; L1-normalize the "mf" rows (6:9) only,
    # applied as a masked VPU multiply (no 5-way concatenate).
    l1 = jnp.sum(jnp.abs(rec[6:9, :]), axis=0, keepdims=True)     # (1, TB)
    inv = pl.reciprocal(jnp.maximum(l1, 1e-12), approx=True)      # EUP slot
    row = jax.lax.broadcasted_iota(jnp.int32, (IN_DIM, 1), 0)
    mf_mask = jnp.logical_and(row >= 6, row < 9)                  # (10, 1)
    rec = jnp.where(mf_mask, rec * inv, rec)                      # (10, TB)

    # single 2-piece sublane concat: [rec (0:10) ; mu (10:13) ; log_var (13:16)]
    out_ref[...] = jnp.concatenate([rec, enc], axis=0)            # (16, TB)


def init_params(key):
    """PyTorch nn.Linear default init: U(-k, k), k = 1/sqrt(fan_in).
    Weights stored in PyTorch layout (out_features, in_features)."""
    sizes = [(HID, IN_DIM), (2 * FEATURES, HID), (HID, FEATURES), (IN_DIM, HID)]
    params = []
    for fan_out, fan_in in sizes:
        key, kw, kb = jax.random.split(key, 3)
        k = 1.0 / math.sqrt(fan_in)
        w = jax.random.uniform(kw, (fan_out, fan_in), jnp.float32, -k, k)
        b = jax.random.uniform(kb, (fan_out,), jnp.float32, -k, k)
        params.append((w, b))
    return params


def pack_params(params):
    """Pack all weights/biases into one (80, 16) f32 slab, 8-row aligned."""
    (w1, b1), (w2, b2), (w3, b3), (w4, b4) = params
    slab = jnp.zeros((SLAB_ROWS, SLAB_COLS), jnp.float32)
    slab = slab.at[_W1T:_W1T + HID, 0:IN_DIM].set(w1)
    slab = slab.at[_B1:_B1 + HID, 0].set(b1)
    slab = slab.at[_W2T:_W2T + HID, 0:HID].set(w2)
    slab = slab.at[_B2:_B2 + HID, 0].set(b2)
    slab = slab.at[_W3T:_W3T + HID, 0:FEATURES].set(w3)
    slab = slab.at[_B3:_B3 + HID, 0].set(b3)
    slab = slab.at[_W4T:_W4T + IN_DIM, 0:HID].set(w4)
    slab = slab.at[_B4:_B4 + IN_DIM, 0].set(b4)
    return slab


def linear_vae_forward(x, slab, eps_scalar, *, tb=512):
    B = x.shape[0]
    # Batch tile (lane columns): multiple of 128, clamped to the padded batch.
    tb = max(128, min(tb, ((B + 127) // 128) * 128))
    nb = pl.cdiv(B, tb)
    b_pad = nb * tb

    # feature-major (10, B); pad with edge replication so padded lanes are
    # copies of real samples and cannot change the global max(log_var).
    xt = x.T
    if b_pad != B:
        xt = jnp.pad(xt, ((0, 0), (0, b_pad - B)), mode="edge")

    x_spec = pl.BlockSpec((IN_DIM, tb), lambda i: (0, i))
    slab_spec = pl.BlockSpec((SLAB_ROWS, SLAB_COLS), lambda i: (0, 0))  # resident

    # ---- pass 1: batch-global max(log_var) (reduction over the grid) -------
    max_lv = pl.pallas_call(
        max_logvar_kernel,
        out_shape=jax.ShapeDtypeStruct((1, 1), jnp.float32),
        grid=(nb,),
        in_specs=[x_spec, slab_spec],
        out_specs=pl.BlockSpec((1, 1), lambda i: (0, 0)),
        compiler_params=pltpu.CompilerParams(dimension_semantics=("arbitrary",)),
    )(xt, slab)

    std = jnp.exp(0.5 * max_lv[0, 0])
    scalars = jnp.stack([jnp.asarray(eps_scalar, jnp.float32),
                         std.astype(jnp.float32)])               # (2,) SMEM

    cost = pl.CostEstimate(
        flops=2 * b_pad * (HID * IN_DIM + HID * HID + HID * FEATURES + IN_DIM * HID),
        transcendentals=b_pad * 21,   # sigmoid ~2 EUP ops x10 + reciprocal
        bytes_accessed=4 * (b_pad * (IN_DIM + 16) + SLAB_ROWS * SLAB_COLS + 2),
    )

    # ---- pass 2: full forward, pipelined over batch tiles -------------------
    packed_t = pl.pallas_call(
        vae_kernel,
        out_shape=jax.ShapeDtypeStruct((16, b_pad), jnp.float32),
        grid=(nb,),
        in_specs=[pl.BlockSpec(memory_space=pltpu.MemorySpace.SMEM),
                  x_spec, slab_spec],
        out_specs=pl.BlockSpec((16, tb), lambda i: (0, i)),
        compiler_params=pltpu.CompilerParams(dimension_semantics=("parallel",)),
        cost_estimate=cost,
    )(scalars, xt, slab)

    packed = packed_t[:, :B].T                                   # (B, 16)
    reconstruction = packed[:, 0:IN_DIM]
    mu = packed[:, IN_DIM:IN_DIM + FEATURES]
    log_var = packed[:, IN_DIM + FEATURES:IN_DIM + 2 * FEATURES]
    return reconstruction, mu, log_var


def reference_forward(x, params, eps):
    """Pure-JAX reference mirroring the PyTorch forward()."""
    (w1, b1), (w2, b2), (w3, b3), (w4, b4) = params
    h = jax.nn.relu(x @ w1.T + b1)
    enc = h @ w2.T + b2
    mu = enc[:, 0:FEATURES]
    log_var = enc[:, FEATURES:2 * FEATURES]
    std = jnp.exp(0.5 * jnp.max(log_var))
    z = mu + eps * std
    h2 = jax.nn.relu(z @ w3.T + b3)
    rec = jax.nn.sigmoid(h2 @ w4.T + b4)
    a, mf, vf = rec[:, 0:6], rec[:, 6:9], rec[:, 9:10]
    l1 = jnp.maximum(jnp.sum(jnp.abs(mf), axis=1, keepdims=True), 1e-12)
    rec = jnp.concatenate([a, mf / l1, vf], axis=1)
    return rec, mu, log_var


if __name__ == "__main__":
    key = jax.random.PRNGKey(0)
    k_params, k_x, k_eps = jax.random.split(key, 3)

    params = init_params(k_params)
    slab = pack_params(params)

    B = 8
    x = jax.random.normal(k_x, (B, IN_DIM), dtype=jnp.float32)
    # scalar eps ~ N(0, 1), matching torch.randn_like(std) where std is 0-d.
    # TODO(synk): torch RNG itself is not reproducible in JAX; eps is an input.
    eps = jax.random.normal(k_eps, (), dtype=jnp.float32)

    rec, mu, log_var = linear_vae_forward(x, slab, eps)
    jax.block_until_ready((rec, mu, log_var))

    # sanity checks: shapes, pure-JAX reference (loose tol: MXU + approx
    # reciprocal), and the L1-normalized "mf" split.
    assert rec.shape == (B, IN_DIM) and mu.shape == (B, FEATURES) and log_var.shape == (B, FEATURES)
    rec_r, mu_r, lv_r = reference_forward(x, params, eps)
    assert bool(jnp.allclose(rec, rec_r, atol=2e-2, rtol=2e-2))
    assert bool(jnp.allclose(mu, mu_r, atol=2e-2, rtol=2e-2))
    assert bool(jnp.allclose(log_var, lv_r, atol=2e-2, rtol=2e-2))
    mf_sums = jnp.sum(jnp.abs(rec[:, 6:9]), axis=1)
    assert bool(jnp.all(jnp.abs(mf_sums - 1.0) < 5e-3))

    print("KERNEL_OK")
</pallas_src>

<mosaic_0001>
module attributes {stable_mosaic.version = 11 : i64} {
  func.func @max_logvar_kernel(%arg0: i32, %arg1: memref<10x128xf32, #tpu.memory_space<vmem>>, %arg2: memref<80x16xf32, #tpu.memory_space<vmem>>, %arg3: memref<1x1xf32, #tpu.memory_space<vmem>>) attributes {dimension_semantics = [#tpu.dimension_semantics<arbitrary>], iteration_bounds = array<i64: 1>, scalar_prefetch = 0 : i64, scratch_operands = 0 : i64, tpu.core_type = #tpu.core_type<tc>, window_params = [{transform_indices = @transform_0, window_bounds = array<i64: 10, 128>}, {pipeline_mode = #tpu.pipeline_mode<synchronous>, transform_indices = @transform_1, window_bounds = array<i64: 80, 16>}, {pipeline_mode = #tpu.pipeline_mode<synchronous>, transform_indices = @transform_2, window_bounds = array<i64: 1, 1>}]} {
    %c0 = arith.constant 0 : index
    %c0_0 = arith.constant 0 : index
    %0 = vector.load %arg1[%c0, %c0_0] : memref<10x128xf32, #tpu.memory_space<vmem>>, vector<10x128xf32>
    %c0_1 = arith.constant 0 : index
    %c0_2 = arith.constant 0 : index
    %1 = vector.load %arg2[%c0_1, %c0_2] : memref<80x16xf32, #tpu.memory_space<vmem>>, vector<6x10xf32>
    %c8 = arith.constant 8 : index
    %c0_3 = arith.constant 0 : index
    %2 = vector.load %arg2[%c8, %c0_3] : memref<80x16xf32, #tpu.memory_space<vmem>>, vector<6x1xf32>
    %c16 = arith.constant 16 : index
    %c0_4 = arith.constant 0 : index
    %3 = vector.load %arg2[%c16, %c0_4] : memref<80x16xf32, #tpu.memory_space<vmem>>, vector<6x6xf32>
    %c24 = arith.constant 24 : index
    %c0_5 = arith.constant 0 : index
    %4 = vector.load %arg2[%c24, %c0_5] : memref<80x16xf32, #tpu.memory_space<vmem>>, vector<6x1xf32>
    %cst = arith.constant dense<0.000000e+00> : vector<6x128xf32>
    %5 = tpu.matmul %1, %0, %cst {dimension_numbers = #tpu.dot_dimension_numbers<[1], [0], [0], [1], [0, 0, 1, 1], [], []>} : vector<6x10xf32>, vector<10x128xf32>, vector<6x128xf32> -> vector<6x128xf32>
    %6 = vector.broadcast %2 : vector<6x1xf32> to vector<6x128xf32>
    %7 = arith.addf %5, %6 : vector<6x128xf32>
    %cst_6 = arith.constant 0.000000e+00 : f32
    %8 = vector.broadcast %cst_6 : f32 to vector<6x128xf32>
    %9 = arith.maximumf %7, %8 : vector<6x128xf32>
    %cst_7 = arith.constant dense<0.000000e+00> : vector<6x128xf32>
    %10 = tpu.matmul %3, %9, %cst_7 {dimension_numbers = #tpu.dot_dimension_numbers<[1], [0], [0], [1], [0, 0, 1, 1], [], []>} : vector<6x6xf32>, vector<6x128xf32>, vector<6x128xf32> -> vector<6x128xf32>
    %11 = vector.broadcast %4 : vector<6x1xf32> to vector<6x128xf32>
    %12 = arith.addf %10, %11 : vector<6x128xf32>
    %13 = vector.extract_strided_slice %12 {offsets = [3, 0], sizes = [3, 128], strides = [1, 1]} : vector<6x128xf32> to vector<3x128xf32>
    %cst_8 = arith.constant dense<0xFF800000> : vector<3xf32>
    %14 = vector.multi_reduction <maximumf>, %13, %cst_8 [1] : vector<3x128xf32> to vector<3xf32>
    %15 = vector.shape_cast %14 : vector<3xf32> to vector<3x1xf32>
    %cst_9 = arith.constant dense<0xFF800000> : vector<1xf32>
    %16 = vector.multi_reduction <maximumf>, %15, %cst_9 [0] : vector<3x1xf32> to vector<1xf32>
    %17 = vector.shape_cast %16 : vector<1xf32> to vector<1x1xf32>
    %c0_i32 = arith.constant 0 : i32
    %18 = arith.cmpi eq, %arg0, %c0_i32 : i32
    %19 = arith.extui %18 : i1 to i32
    %c0_i32_10 = arith.constant 0 : i32
    %20 = arith.cmpi ne, %19, %c0_i32_10 : i32
    scf.if %20 {
      %cst_15 = arith.constant 0xFF800000 : f32
      %24 = vector.broadcast %cst_15 : f32 to vector<1x1xf32>
      %c0_16 = arith.constant 0 : index
      %c0_17 = arith.constant 0 : index
      %25 = vector.load %arg3[%c0_16, %c0_17] : memref<1x1xf32, #tpu.memory_space<vmem>>, vector<1x1xf32>
      tpu.vector_store %arg3[%c0_16, %c0_17], %24 {strides = array<i32>} : memref<1x1xf32, #tpu.memory_space<vmem>>, vector<1x1xf32>,
    } else {
    }
    %c0_11 = arith.constant 0 : index
    %c0_12 = arith.constant 0 : index
    %21 = vector.load %arg3[%c0_11, %c0_12] : memref<1x1xf32, #tpu.memory_space<vmem>>, vector<1x1xf32>
    %22 = arith.maximumf %21, %17 : vector<1x1xf32>
    %c0_13 = arith.constant 0 : index
    %c0_14 = arith.constant 0 : index
    %23 = vector.load %arg3[%c0_13, %c0_14] : memref<1x1xf32, #tpu.memory_space<vmem>>, vector<1x1xf32>
    tpu.vector_store %arg3[%c0_13, %c0_14], %22 {strides = array<i32>} : memref<1x1xf32, #tpu.memory_space<vmem>>, vector<1x1xf32>,
    return
  }
  func.func @transform_0(%arg0: i32) -> (i32, i32) {
    %c0_i32 = arith.constant 0 : i32
    %c0_i32_0 = arith.constant 0 : i32
    return %c0_i32, %arg0 : i32, i32
  }
  func.func @transform_1(%arg0: i32) -> (i32, i32) {
    %c0_i32 = arith.constant 0 : i32
    %c0_i32_0 = arith.constant 0 : i32
    %c0_i32_1 = arith.constant 0 : i32
    return %c0_i32, %c0_i32_0 : i32, i32
  }
  func.func @transform_2(%arg0: i32) -> (i32, i32) {
    %c0_i32 = arith.constant 0 : i32
    %c0_i32_0 = arith.constant 0 : i32
    %c0_i32_1 = arith.constant 0 : i32
    return %c0_i32, %c0_i32_0 : i32, i32
  }
}

</mosaic_0001>

<llo_original>
// kernel: tpu_custom_call.1
$region0: #{tpu_custom_call.1}
  #allocation0 [shape = 'u32[]', space=smem, size = 0x4, offset = 0x4, fixed_abs, tag = 'smem constant byte address 0x4 - core index']
  #allocation1 [shape = 'u32[144,128]{1,0:T(1,128)}', space=vmem, size = 0x12000, scoped, tag = 'internal scratch']
  %s0 = inlined_call_operand.vmem [shape: f32[10,128], index: 0, kind: input, shape index: {}]
  %s1 = inlined_call_operand.vmem [shape: f32[80,16], index: 1, kind: input, shape index: {}]
  %s2 = inlined_call_operand.hbm [shape: f32[1,1], index: 2, kind: output, shape index: {}]
  %s3 = sld [smem:[#allocation0]]
  $region22: #{tpu_custom_call.1} parent=0
    _
  %s5 = ssub.s32 1, %s3
  %s6 = scalar_select 0, %s5, %s3
  $region1: #{tpu_custom_call.1} parent=0
    #allocation2 [shape = 'u8[512]{0}', space=vmem, size = 0x400, scoped, tag = 'output window, operand 0, single buffered']
    #allocation3 [shape = 's32[1]{0}', space=sflag, size = 0x4, scoped, tag = 'scoped memory for tpu_custom_call.1']
    %7 = vsyncpa [#allocation3], 0
    // Predicated region
    $region2: #{tpu_custom_call.1} parent=1 // pred_check
      _
    $region3: #{tpu_custom_call.1} parent=1 // pred_check_branch
      %9 = sbr.rel (0) target = $region5
    $region4: #{tpu_custom_call.1} parent=1 // pred_region
      _
    $region5: #{tpu_custom_call.1} parent=1 // pred_fallthru
      _
    // Predicated region
    $region6: #{tpu_custom_call.1} parent=1 // pred_check
      _
    $region7: #{tpu_custom_call.1} parent=1 // pred_check_branch
      %11 = sbr.rel (0) target = $region9
    $region8: #{tpu_custom_call.1} parent=1 // pred_region
      _
    $region9: #{tpu_custom_call.1} parent=1 // pred_fallthru
      _
    %v12 = vld [vmem:[%s0] sm:$0xff]
    %v13 = vld [vmem:[%s0 + $0x8] sm:$0x3]
    %v14 = vld [vmem:[%s1] sm:$0x3f]
    %v15 = vld [vmem:[%s1 + $0x8] sm:$0x3f]
    %v16 = vld [vmem:[%s1 + $0x10] sm:$0x3f]
    %v17 = vld [vmem:[%s1 + $0x18] sm:$0x3f]
    %19 = vset.pattern.permute.xlu0 0
    %20 = vperm.xlu0 %19, %v15
    %v21 = vpop.permute.xlu0 %20
    %vm23 = vcmask 80896
    %v25 = vsel %vm23, %v14, 0
    %vm27 = vcmask 1041408
    %v29 = vsel %vm27, %v13, 0
    %31 = vmatprep.subr.mxu0 0.0
    %32 = vmatpush1.msra.mxu0 %v12
    %33 = vmatprep.subr.mxu0 0.0
    %34 = vmatpush1.msra.mxu0 %v29
    %35 = vmatprep.subr.mxu0 0.0
    %36 = vmatpush1.msra.mxu0 0.0
    %37 = vmatprep.subr.mxu0 0.0
    %38 = vmatpush1.msra.mxu0 0.0
    %39 = vmatprep.subr.mxu0 0.0
    %40 = vmatpush1.msra.mxu0 0.0
    %41 = vmatprep.subr.mxu0 0.0
    %42 = vmatpush1.msra.mxu0 0.0
    %43 = vmatprep.subr.mxu0 0.0
    %44 = vmatpush1.msra.mxu0 0.0
    %45 = vmatprep.subr.mxu0 0.0
    %46 = vmatpush1.msra.mxu0 0.0
    %47 = vmatprep.subr.mxu0 0.0
    %48 = vmatpush1.msra.mxu0 0.0
    %49 = vmatprep.subr.mxu0 0.0
    %50 = vmatpush1.msra.mxu0 0.0
    %51 = vmatprep.subr.mxu0 0.0
    %52 = vmatpush1.msra.mxu0 0.0
    %53 = vmatprep.subr.mxu0 0.0
    %54 = vmatpush1.msra.mxu0 0.0
    %55 = vmatprep.subr.mxu0 0.0
    %56 = vmatpush1.msra.mxu0 0.0
    %57 = vmatprep.subr.mxu0 0.0
    %58 = vmatpush1.msra.mxu0 0.0
    %59 = vmatprep.subr.mxu0 0.0
    %60 = vmatpush1.msra.mxu0 0.0
    %61 = vmatprep.subr.mxu0 0.0
    %62 = vmatpush1.msra.mxu0 0.0
    %63 = vmatprep.subr.mxu0 0.0
    %64 = vmatpush1.msra.mxu0 0.0
    %65 = vmatprep.subr.mxu0 0.0
    %66 = vmatpush1.msra.mxu0 0.0
    %67 = vmatprep.subr.mxu0 0.0
    %68 = vmatpush1.msra.mxu0 0.0
    %69 = vmatprep.subr.mxu0 0.0
    %70 = vmatpush1.msra.mxu0 0.0
    %71 = vmatprep.subr.mxu0 0.0
    %72 = vmatpush1.msra.mxu0 0.0
    %73 = vmatprep.subr.mxu0 0.0
    %74 = vmatpush1.msra.mxu0 0.0
    %75 = vmatprep.subr.mxu0 0.0
    %76 = vmatpush1.msra.mxu0 0.0
    %77 = vmatprep.subr.mxu0 0.0
    %78 = vmatpush1.msra.mxu0 0.0
    %79 = vmatprep.subr.mxu0 0.0
    %80 = vmatpush1.msra.mxu0 0.0
    %81 = vmatprep.subr.mxu0 0.0
    %82 = vmatpush1.msra.mxu0 0.0
    %83 = vmatprep.subr.mxu0 0.0
    %84 = vmatpush1.msra.mxu0 0.0
    %85 = vmatprep.subr.mxu0 0.0
    %86 = vmatpush1.msra.mxu0 0.0
    %87 = vmatprep.subr.mxu0 0.0
    %88 = vmatpush1.msra.mxu0 0.0
    %89 = vmatprep.subr.mxu0 0.0
    %90 = vmatpush1.msra.mxu0 0.0
    %91 = vmatprep.subr.mxu0 0.0
    %92 = vmatpush1.msra.mxu0 0.0
    %93 = vmatprep.subr.mxu0 0.0
    %94 = vmatpush1.msra.mxu0 0.0
    %95 = vmatprep.mubr.f32.mxu0 0.0
    %96 = vmatmul.mubr.f32.gmra.mrb[0].mxu0 %v25
    %v97 = vpop.f32.mrb[0].mxu0
    %v98 = vadd.f32 %v21, %v97
    %v99 = vpop.f32.mrb[0].mxu0
    %100 = vdwg.mxu0
    %v101 = vmax.f32 %v98, 0.0
    %103 = vset.pattern.permute.xlu0 0
    %104 = vperm.xlu0 %103, %v17
    %v105 = vpop.permute.xlu0 %104
    %vm107 = vcmask 48128
    %v109 = vsel %vm107, %v16, 0
    %vm111 = vcmask 1045504
    %v113 = vsel %vm111, %v101, 0
    %115 = vmatprep.subr.mxu0 0.0
    %116 = vmatpush1.msra.mxu0 %v113
    %117 = vmatprep.subr.mxu0 0.0
    %118 = vmatpush1.msra.mxu0 0.0
    %119 = vmatprep.subr.mxu0 0.0
    %120 = vmatpush1.msra.mxu0 0.0
    %121 = vmatprep.subr.mxu0 0.0
    %122 = vmatpush1.msra.mxu0 0.0
    %123 = vmatprep.subr.mxu0 0.0
    %124 = vmatpush1.msra.mxu0 0.0
    %125 = vmatprep.subr.mxu0 0.0
    %126 = vmatpush1.msra.mxu0 0.0
    %127 = vmatprep.subr.mxu0 0.0
    %128 = vmatpush1.msra.mxu0 0.0
    %129 = vmatprep.subr.mxu0 0.0
    %130 = vmatpush1.msra.mxu0 0.0
    %131 = vmatprep.subr.mxu0 0.0
    %132 = vmatpush1.msra.mxu0 0.0
    %133 = vmatprep.subr.mxu0 0.0
    %134 = vmatpush1.msra.mxu0 0.0
    %135 = vmatprep.subr.mxu0 0.0
    %136 = vmatpush1.msra.mxu0 0.0
    %137 = vmatprep.subr.mxu0 0.0
    %138 = vmatpush1.msra.mxu0 0.0
    %139 = vmatprep.subr.mxu0 0.0
    %140 = vmatpush1.msra.mxu0 0.0
    %141 = vmatprep.subr.mxu0 0.0
    %142 = vmatpush1.msra.mxu0 0.0
    %143 = vmatprep.subr.mxu0 0.0
    %144 = vmatpush1.msra.mxu0 0.0
    %145 = vmatprep.subr.mxu0 0.0
    %146 = vmatpush1.msra.mxu0 0.0
    %147 = vmatprep.subr.mxu0 0.0
    %148 = vmatpush1.msra.mxu0 0.0
    %149 = vmatprep.subr.mxu0 0.0
    %150 = vmatpush1.msra.mxu0 0.0
    %151 = vmatprep.subr.mxu0 0.0
    %152 = vmatpush1.msra.mxu0 0.0
    %153 = vmatprep.subr.mxu0 0.0
    %154 = vmatpush1.msra.mxu0 0.0
    %155 = vmatprep.subr.mxu0 0.0
    %156 = vmatpush1.msra.mxu0 0.0
    %157 = vmatprep.subr.mxu0 0.0
    %158 = vmatpush1.msra.mxu0 0.0
    %159 = vmatprep.subr.mxu0 0.0
    %160 = vmatpush1.msra.mxu0 0.0
    %161 = vmatprep.subr.mxu0 0.0
    %162 = vmatpush1.msra.mxu0 0.0
    %163 = vmatprep.subr.mxu0 0.0
    %164 = vmatpush1.msra.mxu0 0.0
    %165 = vmatprep.subr.mxu0 0.0
    %166 = vmatpush1.msra.mxu0 0.0
    %167 = vmatprep.subr.mxu0 0.0
    %168 = vmatpush1.msra.mxu0 0.0
    %169 = vmatprep.subr.mxu0 0.0
    %170 = vmatpush1.msra.mxu0 0.0
    %171 = vmatprep.subr.mxu0 0.0
    %172 = vmatpush1.msra.mxu0 0.0
    %173 = vmatprep.subr.mxu0 0.0
    %174 = vmatpush1.msra.mxu0 0.0
    %175 = vmatprep.subr.mxu0 0.0
    %176 = vmatpush1.msra.mxu0 0.0
    %177 = vmatprep.subr.mxu0 0.0
    %178 = vmatpush1.msra.mxu0 0.0
    %179 = vmatprep.mubr.f32.mxu0 0.0
    %180 = vmatmul.mubr.f32.gmra.mrb[0].mxu0 %v109
    %v181 = vpop.f32.mrb[0].mxu0
    %v182 = vadd.f32 %v105, %v181
    %v183 = vpop.f32.mrb[0].mxu0
    %184 = vdwg.mxu0
    %vm185 = vcmask 1045507
    %v186 = vsel %vm185, %v182, -inf
    %187 = vmax.xlane.f32.xlu0 %v186
    %v188 = vpop.xlane.xlu0 %187
    %v189 = vsel %vm185, %v188, -inf
    %v190 = vrot.slane %v189, 4
    %v191 = vmax.f32 %v189, %v190
    %v192 = vrot.slane %v191, 2
    %v193 = vmax.f32 %v191, %v192
    %v194 = vrot.slane %v193, 1
    %v195 = vmax.f32 %v193, %v194
    %p196 = scmp.eq.s32.totalorder 0, 0
    // Predicated region
    $region10: #{tpu_custom_call.1} parent=1 // pred_check
      %p197 = pneg %p196
    $region11: #{tpu_custom_call.1} parent=1 // pred_check_branch
      %199 = sbr.rel (%p197) target = $region13
    $region12: #{tpu_custom_call.1} parent=1 // pred_region
      %vm200 = vcmask 0
      %201 = vst.msk [vmem:[#allocation2] sm:$0x1] %vm200, -inf
    $region13: #{tpu_custom_call.1} parent=1 // pred_fallthru
      _
    %v202 = vld [vmem:[#allocation2] sm:$0x1]
    %v203 = vmax.f32 %v202, %v195
    %vm204 = vcmask 0
    %205 = vst.msk [vmem:[#allocation2] sm:$0x1] %vm204, %v203
    // Predicated region
    $region14: #{tpu_custom_call.1} parent=1 // pred_check
      _
    $region15: #{tpu_custom_call.1} parent=1 // pred_check_branch
      %207 = sbr.rel (0) target = $region17
    $region16: #{tpu_custom_call.1} parent=1 // pred_region
      %s209 = ssub.s32 16, 16
      %210 = vsyncadd [#allocation3], %s209
      %s212 = sshll.u32 [#allocation2], 4
      %s213 = int_to_ptr.vmem [resolvable:$true] %s212
      %215 = dma.vmem_to_hbm [thread:$0]  %s213, 16, %s2, [#allocation3]
    $region17: #{tpu_custom_call.1} parent=1 // pred_fallthru
      _
    // Predicated region
    $region18: #{tpu_custom_call.1} parent=1 // pred_check
      _
    $region19: #{tpu_custom_call.1} parent=1 // pred_check_branch
      %217 = sbr.rel (0) target = $region21
    $region20: #{tpu_custom_call.1} parent=1 // pred_region
      %218 = dma.done [#allocation3], 16
    $region21: #{tpu_custom_call.1} parent=1 // pred_fallthru
      _
    %219 = vsyncpa [#allocation3], 1

</llo_original>
